<compile_context>
chip_gen: v6e
topology: v6e:2x2x1
jax: 0.10.0
libtpu: 0.0.40
codegen_flags: <defaults>
</compile_context>

<pallas_src>
import jax
import jax.numpy as jnp
from jax.experimental import pallas as pl
from jax.experimental.pallas import tpu as pltpu

IN_DIM = 81            # 9 * 9 sudoku cells
HID_DIM = 128
OUT_DIM = 81 * 9       # 729 logits
IN_PAD = 128           # lane-dense padded input width   (1 * 128)
OUT_PAD = 768          # lane-dense padded output width  (6 * 128)
MAX_BATCH_TILE = 512   # big MXU M-dim, still tiny in VMEM


def _round_up(x, m):
    return ((x + m - 1) // m) * m


def _cdiv(a, b):
    return (a + b - 1) // b


def _choose_batch_tile(b):
    """Pick a sublane-aligned batch tile.

    Small batches: one grid step covering the whole (padded) batch
    (latency-bound anyway).  Large batches: tile of up to 512 rows, but capped
    so the grid has >= 2 steps (v7x has 2 TensorCores sharing the grid).
    """
    b_al = _round_up(max(b, 1), 8)
    if b_al <= 256:
        return b_al
    bt = MAX_BATCH_TILE
    while bt > 256 and _cdiv(b_al, bt) < 2:
        bt //= 2
    return bt


def sudoku_mlp_kernel(x_ref, w1_ref, b1_ref, w2_ref, b2_ref, o_ref):
    """Fused  relu(x @ W1 + b1) @ W2 + b2  for one batch tile.

    x, W1, W2 are bf16 (MXU operands); accumulation, bias add and ReLU are
    f32; output is written f32 into a lane-dense (BT, 768) tile.
    """
    x = x_ref[...]                                                     # (BT, 128) bf16
    h = jnp.dot(x, w1_ref[...], preferred_element_type=jnp.float32)   # (BT, 128) f32
    h = jnp.maximum(h + b1_ref[...], 0.0)                              # bias + relu, f32 VPU
    h = h.astype(jnp.bfloat16)                                         # back to bf16 for MXU
    o = jnp.dot(h, w2_ref[...], preferred_element_type=jnp.float32)   # (BT, 768) f32
    o_ref[...] = o + b2_ref[...]


def sudoku_forward(x, params):
    """x: (B, 9, 9) or (B, 81) float -> (B, 9, 9, 9) float32 logits."""
    w1, b1, w2, b2 = params
    x2 = x.reshape(-1, IN_DIM).astype(jnp.float32)
    b = x2.shape[0]

    bt = _choose_batch_tile(b)
    b_pad = _round_up(b, bt)
    grid = b_pad // bt

    # --- pad & cast operands (zero padding => math unchanged) ---------------
    x_p = jnp.pad(x2, ((0, b_pad - b), (0, IN_PAD - IN_DIM))).astype(jnp.bfloat16)
    w1_p = jnp.pad(w1, ((0, IN_PAD - IN_DIM), (0, 0))).astype(jnp.bfloat16)      # (128, 128)
    b1_p = b1.reshape(1, HID_DIM).astype(jnp.float32)                            # (1, 128)
    w2_p = jnp.pad(w2, ((0, 0), (0, OUT_PAD - OUT_DIM))).astype(jnp.bfloat16)    # (128, 768)
    b2_p = jnp.pad(b2.reshape(1, OUT_DIM),
                   ((0, 0), (0, OUT_PAD - OUT_DIM))).astype(jnp.float32)         # (1, 768)

    out = pl.pallas_call(
        sudoku_mlp_kernel,
        out_shape=jax.ShapeDtypeStruct((b_pad, OUT_PAD), jnp.float32),
        grid_spec=pltpu.PrefetchScalarGridSpec(
            num_scalar_prefetch=0,
            grid=(grid,),
            in_specs=[
                pl.BlockSpec((bt, IN_PAD), lambda i: (i, 0)),       # x tile
                pl.BlockSpec((IN_PAD, HID_DIM), lambda i: (0, 0)),  # W1 (VMEM-resident)
                pl.BlockSpec((1, HID_DIM), lambda i: (0, 0)),       # b1
                pl.BlockSpec((HID_DIM, OUT_PAD), lambda i: (0, 0)), # W2 (VMEM-resident)
                pl.BlockSpec((1, OUT_PAD), lambda i: (0, 0)),       # b2
            ],
            out_specs=pl.BlockSpec((bt, OUT_PAD), lambda i: (i, 0)),
        ),
        compiler_params=pltpu.CompilerParams(
            dimension_semantics=("parallel",)),
    )(x_p, w1_p, b1_p, w2_p, b2_p)

    return out[:b, :OUT_DIM].reshape(-1, 9, 9, 9)


def init_params(key):
    """Deterministic init mimicking nn.Linear (uniform(-1/sqrt(fan_in), ...)).

    Weights stored as (in, out): transpose of PyTorch's (out, in) layout so the
    kernel computes y = x @ W + b directly.
    """
    k1, k2, k3, k4 = jax.random.split(key, 4)
    s1 = 1.0 / jnp.sqrt(jnp.float32(IN_DIM))
    s2 = 1.0 / jnp.sqrt(jnp.float32(HID_DIM))
    w1 = jax.random.uniform(k1, (IN_DIM, HID_DIM), jnp.float32, -s1, s1)
    b1 = jax.random.uniform(k2, (1, HID_DIM), jnp.float32, -s1, s1)
    w2 = jax.random.uniform(k3, (HID_DIM, OUT_DIM), jnp.float32, -s2, s2)
    b2 = jax.random.uniform(k4, (1, OUT_DIM), jnp.float32, -s2, s2)
    return w1, b1, w2, b2


def reference_forward(x, params):
    """Pure-JAX reference matching the kernel's bf16-operand / f32-accum numerics."""
    w1, b1, w2, b2 = params
    x2 = x.reshape(-1, IN_DIM).astype(jnp.float32)
    h = jnp.dot(x2.astype(jnp.bfloat16), w1.astype(jnp.bfloat16),
                preferred_element_type=jnp.float32) + b1
    h = jnp.maximum(h, 0.0)
    o = jnp.dot(h.astype(jnp.bfloat16), w2.astype(jnp.bfloat16),
                preferred_element_type=jnp.float32) + b2
    return o.reshape(-1, 9, 9, 9)


if __name__ == "__main__":
    key = jax.random.PRNGKey(0)
    k_params, k_x1, k_x2 = jax.random.split(key, 3)
    params = init_params(k_params)

    fwd = jax.jit(sudoku_forward)

    # Small case (matches the module's natural input): batch of 2 boards, values in [0, 9].
    x_small = jax.random.randint(k_x1, (2, 9, 9), 0, 10).astype(jnp.float32)
    y_small = jax.block_until_ready(fwd(x_small, params))
    y_small_ref = reference_forward(x_small, params)
    assert y_small.shape == (2, 9, 9, 9), y_small.shape
    assert jnp.allclose(y_small, y_small_ref, atol=1e-3, rtol=1e-3), "small-batch mismatch"

    # Larger, non-tile-multiple batch to exercise the multi-step tiled grid + padding path.
    x_big = jax.random.randint(k_x2, (600, 9, 9), 0, 10).astype(jnp.float32)
    y_big = jax.block_until_ready(fwd(x_big, params))
    y_big_ref = reference_forward(x_big, params)
    assert y_big.shape == (600, 9, 9, 9), y_big.shape
    assert jnp.allclose(y_big, y_big_ref, atol=1e-3, rtol=1e-3), "large-batch mismatch"

    print("KERNEL_OK")
</pallas_src>

<mosaic_0001>
module attributes {stable_mosaic.version = 11 : i64} {
  func.func @sudoku_mlp_kernel(%arg0: i32, %arg1: memref<8x128xbf16, #tpu.memory_space<vmem>>, %arg2: memref<128x128xbf16, #tpu.memory_space<vmem>>, %arg3: memref<1x128xf32, #tpu.memory_space<vmem>>, %arg4: memref<128x768xbf16, #tpu.memory_space<vmem>>, %arg5: memref<1x768xf32, #tpu.memory_space<vmem>>, %arg6: memref<8x768xf32, #tpu.memory_space<vmem>>) attributes {dimension_semantics = [#tpu.dimension_semantics<parallel>], iteration_bounds = array<i64: 1>, scalar_prefetch = 0 : i64, scratch_operands = 0 : i64, tpu.core_type = #tpu.core_type<tc>, window_params = [{transform_indices = @transform_0, window_bounds = array<i64: 8, 128>}, {pipeline_mode = #tpu.pipeline_mode<synchronous>, transform_indices = @transform_1, window_bounds = array<i64: 128, 128>}, {pipeline_mode = #tpu.pipeline_mode<synchronous>, transform_indices = @transform_2, window_bounds = array<i64: 1, 128>}, {pipeline_mode = #tpu.pipeline_mode<synchronous>, transform_indices = @transform_3, window_bounds = array<i64: 128, 768>}, {pipeline_mode = #tpu.pipeline_mode<synchronous>, transform_indices = @transform_4, window_bounds = array<i64: 1, 768>}, {transform_indices = @transform_5, window_bounds = array<i64: 8, 768>}]} {
    %c0 = arith.constant 0 : index
    %c0_0 = arith.constant 0 : index
    %0 = vector.load %arg1[%c0, %c0_0] : memref<8x128xbf16, #tpu.memory_space<vmem>>, vector<8x128xbf16>
    %c0_1 = arith.constant 0 : index
    %c0_2 = arith.constant 0 : index
    %1 = vector.load %arg2[%c0_1, %c0_2] : memref<128x128xbf16, #tpu.memory_space<vmem>>, vector<128x128xbf16>
    %cst = arith.constant dense<0.000000e+00> : vector<8x128xf32>
    %2 = tpu.matmul %0, %1, %cst {dimension_numbers = #tpu.dot_dimension_numbers<[1], [0], [0], [1], [0, 0, 1, 1], [], []>} : vector<8x128xbf16>, vector<128x128xbf16>, vector<8x128xf32> -> vector<8x128xf32>
    %c0_3 = arith.constant 0 : index
    %c0_4 = arith.constant 0 : index
    %3 = vector.load %arg3[%c0_3, %c0_4] : memref<1x128xf32, #tpu.memory_space<vmem>>, vector<1x128xf32>
    %4 = vector.broadcast %3 : vector<1x128xf32> to vector<8x128xf32>
    %5 = arith.addf %2, %4 : vector<8x128xf32>
    %cst_5 = arith.constant 0.000000e+00 : f32
    %6 = vector.broadcast %cst_5 : f32 to vector<8x128xf32>
    %7 = arith.maximumf %5, %6 : vector<8x128xf32>
    %8 = arith.truncf %7 : vector<8x128xf32> to vector<8x128xbf16>
    %c0_6 = arith.constant 0 : index
    %c0_7 = arith.constant 0 : index
    %9 = vector.load %arg4[%c0_6, %c0_7] : memref<128x768xbf16, #tpu.memory_space<vmem>>, vector<128x768xbf16>
    %cst_8 = arith.constant dense<0.000000e+00> : vector<8x768xf32>
    %10 = tpu.matmul %8, %9, %cst_8 {dimension_numbers = #tpu.dot_dimension_numbers<[1], [0], [0], [1], [0, 0, 1, 1], [], []>} : vector<8x128xbf16>, vector<128x768xbf16>, vector<8x768xf32> -> vector<8x768xf32>
    %c0_9 = arith.constant 0 : index
    %c0_10 = arith.constant 0 : index
    %11 = vector.load %arg5[%c0_9, %c0_10] : memref<1x768xf32, #tpu.memory_space<vmem>>, vector<1x768xf32>
    %12 = vector.broadcast %11 : vector<1x768xf32> to vector<8x768xf32>
    %13 = arith.addf %10, %12 : vector<8x768xf32>
    %c0_11 = arith.constant 0 : index
    %c0_12 = arith.constant 0 : index
    %14 = vector.load %arg6[%c0_11, %c0_12] : memref<8x768xf32, #tpu.memory_space<vmem>>, vector<8x768xf32>
    tpu.vector_store %arg6[%c0_11, %c0_12], %13 {strides = array<i32>} : memref<8x768xf32, #tpu.memory_space<vmem>>, vector<8x768xf32>,
    return
  }
  func.func @transform_0(%arg0: i32) -> (i32, i32) {
    %c0_i32 = arith.constant 0 : i32
    %c0_i32_0 = arith.constant 0 : i32
    return %arg0, %c0_i32 : i32, i32
  }
  func.func @transform_1(%arg0: i32) -> (i32, i32) {
    %c0_i32 = arith.constant 0 : i32
    %c0_i32_0 = arith.constant 0 : i32
    %c0_i32_1 = arith.constant 0 : i32
    return %c0_i32, %c0_i32_0 : i32, i32
  }
  func.func @transform_2(%arg0: i32) -> (i32, i32) {
    %c0_i32 = arith.constant 0 : i32
    %c0_i32_0 = arith.constant 0 : i32
    %c0_i32_1 = arith.constant 0 : i32
    return %c0_i32, %c0_i32_0 : i32, i32
  }
  func.func @transform_3(%arg0: i32) -> (i32, i32) {
    %c0_i32 = arith.constant 0 : i32
    %c0_i32_0 = arith.constant 0 : i32
    %c0_i32_1 = arith.constant 0 : i32
    return %c0_i32, %c0_i32_0 : i32, i32
  }
  func.func @transform_4(%arg0: i32) -> (i32, i32) {
    %c0_i32 = arith.constant 0 : i32
    %c0_i32_0 = arith.constant 0 : i32
    %c0_i32_1 = arith.constant 0 : i32
    return %c0_i32, %c0_i32_0 : i32, i32
  }
  func.func @transform_5(%arg0: i32) -> (i32, i32) {
    %c0_i32 = arith.constant 0 : i32
    %c0_i32_0 = arith.constant 0 : i32
    return %arg0, %c0_i32 : i32, i32
  }
}

</mosaic_0001>

<llo_original>
// kernel: sudoku_forward.1
$region0: #{sudoku_forward.1}
  #allocation0 [shape = 'u32[]', space=smem, size = 0x4, offset = 0x4, fixed_abs, tag = 'smem constant byte address 0x4 - core index']
  #allocation1 [shape = 'u32[144,128]{1,0:T(1,128)}', space=vmem, size = 0x12000, scoped, tag = 'internal scratch']
  %s0 = inlined_call_operand.vmem [shape: bf16[8,128], index: 0, kind: input, shape index: {}]
  %s1 = inlined_call_operand.vmem [shape: bf16[128,128], index: 1, kind: input, shape index: {}]
  %s2 = inlined_call_operand.vmem [shape: f32[1,128], index: 2, kind: input, shape index: {}]
  %s3 = inlined_call_operand.vmem [shape: bf16[128,768], index: 3, kind: input, shape index: {}]
  %s4 = inlined_call_operand.vmem [shape: f32[1,768], index: 4, kind: input, shape index: {}]
  %s5 = inlined_call_operand.vmem [shape: f32[8,768], index: 5, kind: output, shape index: {}]
  %s6 = sld [smem:[#allocation0]]
  $region30: #{sudoku_forward.1} parent=0
    _
  %s8 = ssub.s32 1, %s6
  %s9 = scalar_select 0, %s8, %s6
  // Predicated region
  $region2: #{sudoku_forward.1} parent=0 // pred_check
    _
  $region3: #{sudoku_forward.1} parent=0 // pred_check_branch
    %11 = sbr.rel (0) target = $region5
  $region4: #{sudoku_forward.1} parent=0 // pred_region
    _
  $region5: #{sudoku_forward.1} parent=0 // pred_fallthru
    _
  // Predicated region
  $region6: #{sudoku_forward.1} parent=0 // pred_check
    _
  $region7: #{sudoku_forward.1} parent=0 // pred_check_branch
    %13 = sbr.rel (0) target = $region9
  $region8: #{sudoku_forward.1} parent=0 // pred_region
    _
  $region9: #{sudoku_forward.1} parent=0 // pred_fallthru
    _
  // Predicated region
  $region10: #{sudoku_forward.1} parent=0 // pred_check
    _
  $region11: #{sudoku_forward.1} parent=0 // pred_check_branch
    %15 = sbr.rel (0) target = $region13
  $region12: #{sudoku_forward.1} parent=0 // pred_region
    _
  $region13: #{sudoku_forward.1} parent=0 // pred_fallthru
    _
  // Predicated region
  $region14: #{sudoku_forward.1} parent=0 // pred_check
    _
  $region15: #{sudoku_forward.1} parent=0 // pred_check_branch
    %17 = sbr.rel (0) target = $region17
  $region16: #{sudoku_forward.1} parent=0 // pred_region
    _
  $region17: #{sudoku_forward.1} parent=0 // pred_fallthru
    _
  // Predicated region
  $region18: #{sudoku_forward.1} parent=0 // pred_check
    _
  $region19: #{sudoku_forward.1} parent=0 // pred_check_branch
    %19 = sbr.rel (0) target = $region21
  $region20: #{sudoku_forward.1} parent=0 // pred_region
    _
  $region21: #{sudoku_forward.1} parent=0 // pred_fallthru
    _
  %v21 = vld [vmem:[%s0] sm:$0xf]
  %v22 = vld [vmem:[%s1] sm:$0xf]
  %v23 = vld [vmem:[%s1 + $0x4] sm:$0xf]
  %v24 = vld [vmem:[%s1 + $0x8] sm:$0xf]
  %v25 = vld [vmem:[%s1 + $0xc] sm:$0xf]
  %v26 = vld [vmem:[%s1 + $0x10] sm:$0xf]
  %v27 = vld [vmem:[%s1 + $0x14] sm:$0xf]
  %v28 = vld [vmem:[%s1 + $0x18] sm:$0xf]
  %v29 = vld [vmem:[%s1 + $0x1c] sm:$0xf]
  %v30 = vld [vmem:[%s1 + $0x20] sm:$0xf]
  %v31 = vld [vmem:[%s1 + $0x24] sm:$0xf]
  %v32 = vld [vmem:[%s1 + $0x28] sm:$0xf]
  %v33 = vld [vmem:[%s1 + $0x2c] sm:$0xf]
  %v34 = vld [vmem:[%s1 + $0x30] sm:$0xf]
  %v35 = vld [vmem:[%s1 + $0x34] sm:$0xf]
  %v36 = vld [vmem:[%s1 + $0x38] sm:$0xf]
  %v37 = vld [vmem:[%s1 + $0x3c] sm:$0xf]
  %v38 = vld [vmem:[%s2] sm:$0x1]
  %v40 = vlaneseq
  %v41 = vshrl.u32 %v40, 7
  %v42 = vsub.s32 0, %v41
  %v43 = vrot.slane %v38, %v42
  %v61 = vunpack.c.l.b16 %v22
  %v62 = vunpack.c.l.b16 %v23
  %v63 = vunpack.c.l.b16 %v24
  %v64 = vunpack.c.l.b16 %v25
  %v65 = vunpack.c.l.b16 %v26
  %v66 = vunpack.c.l.b16 %v27
  %v67 = vunpack.c.l.b16 %v28
  %v68 = vunpack.c.l.b16 %v29
  %v69 = vunpack.c.l.b16 %v30
  %v70 = vunpack.c.l.b16 %v31
  %v71 = vunpack.c.l.b16 %v32
  %v72 = vunpack.c.l.b16 %v33
  %v73 = vunpack.c.l.b16 %v34
  %v74 = vunpack.c.l.b16 %v35
  %v75 = vunpack.c.l.b16 %v36
  %v76 = vunpack.c.l.b16 %v37
  %v77 = vpack.c.b16 %v62, %v61
  %v78 = vpack.c.b16 %v64, %v63
  %v79 = vpack.c.b16 %v66, %v65
  %v80 = vpack.c.b16 %v68, %v67
  %v81 = vpack.c.b16 %v70, %v69
  %v82 = vpack.c.b16 %v72, %v71
  %v83 = vpack.c.b16 %v74, %v73
  %v84 = vpack.c.b16 %v76, %v75
  %93 = vmatprep.subr.bf16.mxu0 0
  %94 = vmatpush1.bf16.msra.mxu0 %v84
  %95 = vmatprep.subr.bf16.mxu0 0
  %96 = vmatpush1.bf16.msra.mxu0 %v83
  %97 = vmatprep.subr.bf16.mxu0 0
  %98 = vmatpush1.bf16.msra.mxu0 %v82
  %99 = vmatprep.subr.bf16.mxu0 0
  %100 = vmatpush1.bf16.msra.mxu0 %v81
  %101 = vmatprep.subr.bf16.mxu0 0
  %102 = vmatpush1.bf16.msra.mxu0 %v80
  %103 = vmatprep.subr.bf16.mxu0 0
  %104 = vmatpush1.bf16.msra.mxu0 %v79
  %105 = vmatprep.subr.bf16.mxu0 0
  %106 = vmatpush1.bf16.msra.mxu0 %v78
  %107 = vmatprep.subr.bf16.mxu0 0
  %108 = vmatpush1.bf16.msra.mxu0 %v77
  %109 = vmatprep.subr.bf16.mxu0 0
  %110 = vmatpush2.bf16.msra.mxu0 0
  %111 = vmatprep.subr.bf16.mxu0 0
  %112 = vmatpush2.bf16.msra.mxu0 0
  %113 = vmatprep.subr.bf16.mxu0 0
  %114 = vmatpush2.bf16.msra.mxu0 0
  %115 = vmatprep.subr.bf16.mxu0 0
  %116 = vmatpush2.bf16.msra.mxu0 0
  %117 = vmatprep.subr.bf16.mxu0 0
  %118 = vmatpush2.bf16.msra.mxu0 0
  %119 = vmatprep.subr.bf16.mxu0 0
  %120 = vmatpush2.bf16.msra.mxu0 0
  %121 = vmatprep.subr.bf16.mxu0 0
  %122 = vmatpush2.bf16.msra.mxu0 0
  %123 = vmatprep.subr.bf16.mxu0 0
  %124 = vmatpush2.bf16.msra.mxu0 0
  %125 = vmatprep.mubr.bf16.mxu0 0
  %126 = vmatmul.mubr.bf16.gmra.mxu0 %v21
  %v127 = vpop.f32.mrf.mxu0
  %v128 = vadd.f32 %v43, %v127
  %v129 = vpop.f32.mrf.mxu0
  %v130 = vpop.f32.mrf.mxu0
  %v131 = vpop.f32.mrf.mxu0
  %132 = vdwg.mxu0
  %v133 = vmax.f32 %v128, 0.0
  %v134 = vpack.c.bf16 %v133, %v133
  %v135 = vld [vmem:[%s3] sm:$0xff]
  %v136 = vld [vmem:[%s3 + $0x8] sm:$0xff]
  %v137 = vld [vmem:[%s3 + $0x10] sm:$0xff]
  %v138 = vld [vmem:[%s3 + $0x18] sm:$0xff]
  %v139 = vld [vmem:[%s3 + $0x20] sm:$0xff]
  %v140 = vld [vmem:[%s3 + $0x28] sm:$0xff]
  %v141 = vld [vmem:[%s3 + $0x30] sm:$0xff]
  %v142 = vld [vmem:[%s3 + $0x38] sm:$0xff]
  %v143 = vld [vmem:[%s3 + $0x40] sm:$0xff]
  %v144 = vld [vmem:[%s3 + $0x48] sm:$0xff]
  %v145 = vld [vmem:[%s3 + $0x50] sm:$0xff]
  %v146 = vld [vmem:[%s3 + $0x58] sm:$0xff]
  %v147 = vld [vmem:[%s3 + $0x60] sm:$0xff]
  %v148 = vld [vmem:[%s3 + $0x68] sm:$0xff]
  %v149 = vld [vmem:[%s3 + $0x70] sm:$0xff]
  %v150 = vld [vmem:[%s3 + $0x78] sm:$0xff]
  %v151 = vld [vmem:[%s3 + $0x80] sm:$0xff]
  %v152 = vld [vmem:[%s3 + $0x88] sm:$0xff]
  %v153 = vld [vmem:[%s3 + $0x90] sm:$0xff]
  %v154 = vld [vmem:[%s3 + $0x98] sm:$0xff]
  %v155 = vld [vmem:[%s3 + $0xa0] sm:$0xff]
  %v156 = vld [vmem:[%s3 + $0xa8] sm:$0xff]
  %v157 = vld [vmem:[%s3 + $0xb0] sm:$0xff]
  %v158 = vld [vmem:[%s3 + $0xb8] sm:$0xff]
  %v159 = vld [vmem:[%s3 + $0xc0] sm:$0xff]
  %v160 = vld [vmem:[%s3 + $0xc8] sm:$0xff]
  %v161 = vld [vmem:[%s3 + $0xd0] sm:$0xff]
  %v162 = vld [vmem:[%s3 + $0xd8] sm:$0xff]
  %v163 = vld [vmem:[%s3 + $0xe0] sm:$0xff]
  %v164 = vld [vmem:[%s3 + $0xe8] sm:$0xff]
  %v165 = vld [vmem:[%s3 + $0xf0] sm:$0xff]
  %v166 = vld [vmem:[%s3 + $0xf8] sm:$0xff]
  %v167 = vld [vmem:[%s3 + $0x100] sm:$0xff]
  %v168 = vld [vmem:[%s3 + $0x108] sm:$0xff]
  %v169 = vld [vmem:[%s3 + $0x110] sm:$0xff]
  %v170 = vld [vmem:[%s3 + $0x118] sm:$0xff]
  %v171 = vld [vmem:[%s3 + $0x120] sm:$0xff]
  %v172 = vld [vmem:[%s3 + $0x128] sm:$0xff]
  %v173 = vld [vmem:[%s3 + $0x130] sm:$0xff]
  %v174 = vld [vmem:[%s3 + $0x138] sm:$0xff]
  %v175 = vld [vmem:[%s3 + $0x140] sm:$0xff]
  %v176 = vld [vmem:[%s3 + $0x148] sm:$0xff]
  %v177 = vld [vmem:[%s3 + $0x150] sm:$0xff]
  %v178 = vld [vmem:[%s3 + $0x158] sm:$0xff]
  %v179 = vld [vmem:[%s3 + $0x160] sm:$0xff]
  %v180 = vld [vmem:[%s3 + $0x168] sm:$0xff]
  %v181 = vld [vmem:[%s3 + $0x170] sm:$0xff]
  %v182 = vld [vmem:[%s3 + $0x178] sm:$0xff]
  %v183 = vld [vmem:[%s4] sm:$0x3f]
  %v185 = vlaneseq
  %v186 = vshrl.u32 %v185, 7
  %v187 = vsub.s32 0, %v186
  %v188 = vrot.slane %v183, %v187
  %v189 = vlaneseq
  %v190 = vshrl.u32 %v189, 7
  %v191 = vsub.s32 1, %v190
  %v192 = vrot.slane %v183, %v191
  %v193 = vlaneseq
  %v194 = vshrl.u32 %v193, 7
  %v195 = vsub.s32 2, %v194
  %v196 = vrot.slane %v183, %v195
  %v197 = vlaneseq
  %v198 = vshrl.u32 %v197, 7
  %v199 = vsub.s32 3, %v198
  %v200 = vrot.slane %v183, %v199
  %v201 = vlaneseq
  %v202 = vshrl.u32 %v201, 7
  %v203 = vsub.s32 4, %v202
  %v204 = vrot.slane %v183, %v203
  %v205 = vlaneseq
  %v206 = vshrl.u32 %v205, 7
  %v207 = vsub.s32 5, %v206
  %v208 = vrot.slane %v183, %v207
  %v263 = vunpack.c.l.b16 %v135
  %v264 = vunpack.c.h.b16 %v135
  %v265 = vunpack.c.l.b16 %v136
  %v266 = vunpack.c.h.b16 %v136
  %v267 = vunpack.c.l.b16 %v137
  %v268 = vunpack.c.h.b16 %v137
  %v269 = vunpack.c.l.b16 %v138
  %v270 = vunpack.c.h.b16 %v138
  %v271 = vunpack.c.l.b16 %v139
  %v272 = vunpack.c.h.b16 %v139
  %v273 = vunpack.c.l.b16 %v140
  %v274 = vunpack.c.h.b16 %v140
  %v275 = vunpack.c.l.b16 %v141
  %v276 = vunpack.c.h.b16 %v141
  %v277 = vunpack.c.l.b16 %v142
  %v278 = vunpack.c.h.b16 %v142
  %v279 = vunpack.c.l.b16 %v143
  %v280 = vunpack.c.h.b16 %v143
  %v281 = vunpack.c.l.b16 %v144
  %v282 = vunpack.c.h.b16 %v144
  %v283 = vunpack.c.l.b16 %v145
  %v284 = vunpack.c.h.b16 %v145
  %v285 = vunpack.c.l.b16 %v146
  %v286 = vunpack.c.h.b16 %v146
  %v287 = vunpack.c.l.b16 %v147
  %v288 = vunpack.c.h.b16 %v147
  %v289 = vunpack.c.l.b16 %v148
  %v290 = vunpack.c.h.b16 %v148
  %v291 = vunpack.c.l.b16 %v149
  %v292 = vunpack.c.h.b16 %v149
  %v293 = vunpack.c.l.b16 %v150
  %v294 = vunpack.c.h.b16 %v150
  %v295 = vunpack.c.l.b16 %v151
  %v296 = vunpack.c.h.b16 %v151
  %v297 = vunpack.c.l.b16 %v152
  %v298 = vunpack.c.h.b16 %v152
  %v299 = vunpack.c.l.b16 %v153
  %v300 = vunpack.c.h.b16 %v153
  %v301 = vunpack.c.l.b16 %v154
  %v302 = vunpack.c.h.b16 %v154
  %v303 = vunpack.c.l.b16 %v155
  %v304 = vunpack.c.h.b16 %v155
  %v305 = vunpack.c.l.b16 %v156
  %v306 = vunpack.c.h.b16 %v156
  %v307 = vunpack.c.l.b16 %v157
  %v308 = vunpack.c.h.b16 %v157
  %v309 = vunpack.c.l.b16 %v158
  %v310 = vunpack.c.h.b16 %v158
  %v311 = vunpack.c.l.b16 %v159
  %v312 = vunpack.c.h.b16 %v159
  %v313 = vunpack.c.l.b16 %v160
  %v314 = vunpack.c.h.b16 %v160
  %v315 = vunpack.c.l.b16 %v161
  %v316 = vunpack.c.h.b16 %v161
  %v317 = vunpack.c.l.b16 %v162
  %v318 = vunpack.c.h.b16 %v162
  %v319 = vunpack.c.l.b16 %v163
  %v320 = vunpack.c.h.b16 %v163
  %v321 = vunpack.c.l.b16 %v164
  %v322 = vunpack.c.h.b16 %v164
  %v323 = vunpack.c.l.b16 %v165
  %v324 = vunpack.c.h.b16 %v165
  %v325 = vunpack.c.l.b16 %v166
  %v326 = vunpack.c.h.b16 %v166
  %v327 = vunpack.c.l.b16 %v167
  %v328 = vunpack.c.h.b16 %v167
  %v329 = vunpack.c.l.b16 %v168
  %v330 = vunpack.c.h.b16 %v168
  %v331 = vunpack.c.l.b16 %v169
  %v332 = vunpack.c.h.b16 %v169
  %v333 = vunpack.c.l.b16 %v170
  %v334 = vunpack.c.h.b16 %v170
  %v335 = vunpack.c.l.b16 %v171
  %v336 = vunpack.c.h.b16 %v171
  %v337 = vunpack.c.l.b16 %v172
  %v338 = vunpack.c.h.b16 %v172
  %v339 = vunpack.c.l.b16 %v173
  %v340 = vunpack.c.h.b16 %v173
  %v341 = vunpack.c.l.b16 %v174
  %v342 = vunpack.c.h.b16 %v174
  %v343 = vunpack.c.l.b16 %v175
  %v344 = vunpack.c.h.b16 %v175
  %v345 = vunpack.c.l.b16 %v176
  %v346 = vunpack.c.h.b16 %v176
  %v347 = vunpack.c.l.b16 %v177
  %v348 = vunpack.c.h.b16 %v177
  %v349 = vunpack.c.l.b16 %v178
  %v350 = vunpack.c.h.b16 %v178
  %v351 = vunpack.c.l.b16 %v179
  %v352 = vunpack.c.h.b16 %v179
  %v353 = vunpack.c.l.b16 %v180
  %v354 = vunpack.c.h.b16 %v180
  %v355 = vunpack.c.l.b16 %v181
  %v356 = vunpack.c.h.b16 %v181
  %v357 = vunpack.c.l.b16 %v182
  %v358 = vunpack.c.h.b16 %v182
  %v359 = vpack.c.b16 %v269, %v263
  %v360 = vpack.c.b16 %v270, %v264
  %v361 = vpack.c.b16 %v271, %v265
  %v362 = vpack.c.b16 %v272, %v266
  %v363 = vpack.c.b16 %v273, %v267
  %v364 = vpack.c.b16 %v274, %v268
  %v365 = vpack.c.b16 %v281, %v275
  %v366 = vpack.c.b16 %v282, %v276
  %v367 = vpack.c.b16 %v283, %v277
  %v368 = vpack.c.b16 %v284, %v278
  %v369 = vpack.c.b16 %v285, %v279
  %v370 = vpack.c.b16 %v286, %v280
  %v371 = vpack.c.b16 %v293, %v287
  %v372 = vpack.c.b16 %v294, %v288
  %v373 = vpack.c.b16 %v295, %v289
  %v374 = vpack.c.b16 %v296, %v290
  %v375 = vpack.c.b16 %v297, %v291
  %v376 = vpack.c.b16 %v298, %v292
  %v377 = vpack.c.b16 %v305, %v299
  %v378 = vpack.c.b16 %v306, %v300
  %v379 = vpack.c.b16 %v307, %v301
  %v380 = vpack.c.b16 %v308, %v302
  %v381 = vpack.c.b16 %v309, %v303
  %v382 = vpack.c.b16 %v310, %v304
  %v383 = vpack.c.b16 %v317, %v311
  %v384 = vpack.c.b16 %v318, %v312
  %v385 = vpack.c.b16 %v319, %v313
  %v386 = vpack.c.b16 %v320, %v314
  %v387 = vpack.c.b16 %v321, %v315
  %v388 = vpack.c.b16 %v322, %v316
  %v389 = vpack.c.b16 %v329, %v323
  %v390 = vpack.c.b16 %v330, %v324
  %v391 = vpack.c.b16 %v331, %v325
  %v392 = vpack.c.b16 %v332, %v326
  %v393 = vpack.c.b16 %v333, %v327
  %v394 = vpack.c.b16 %v334, %v328
  %v395 = vpack.c.b16 %v341, %v335
  %v396 = vpack.c.b16 %v342, %v336
  %v397 = vpack.c.b16 %v343, %v337
  %v398 = vpack.c.b16 %v344, %v338
  %v399 = vpack.c.b16 %v345, %v339
  %v400 = vpack.c.b16 %v346, %v340
  %v401 = vpack.c.b16 %v353, %v347
  %v402 = vpack.c.b16 %v354, %v348
  %v403 = vpack.c.b16 %v355, %v349
  %v404 = vpack.c.b16 %v356, %v350
  %v405 = vpack.c.b16 %v357, %v351
  %v406 = vpack.c.b16 %v358, %v352
  %455 = vmatprep.subr.bf16.mxu0 %v402
  %456 = vmatpush1.bf16.msra.mxu0 %v401
  %457 = vmatprep.subr.bf16.mxu0 %v396
  %458 = vmatpush1.bf16.msra.mxu0 %v395
  %459 = vmatprep.subr.bf16.mxu0 %v390
  %460 = vmatpush1.bf16.msra.mxu0 %v389
  %461 = vmatprep.subr.bf16.mxu0 %v384
  %462 = vmatpush1.bf16.msra.mxu0 %v383
  %463 = vmatprep.subr.bf16.mxu0 %v378
  %464 = vmatpush1.bf16.msra.mxu0 %v377
  %465 = vmatprep.subr.bf16.mxu0 %v372
  %466 = vmatpush1.bf16.msra.mxu0 %v371
  %467 = vmatprep.subr.bf16.mxu0 %v366
  %468 = vmatpush1.bf16.msra.mxu0 %v365
  %469 = vmatprep.subr.bf16.mxu0 %v360
  %470 = vmatpush1.bf16.msra.mxu0 %v359
  %471 = vmatprep.subr.bf16.mxu0 0
  %472 = vmatpush2.bf16.msra.mxu0 0
  %473 = vmatprep.subr.bf16.mxu0 0
  %474 = vmatpush2.bf16.msra.mxu0 0
  %475 = vmatprep.subr.bf16.mxu0 0
  %476 = vmatpush2.bf16.msra.mxu0 0
  %477 = vmatprep.subr.bf16.mxu0 0
  %478 = vmatpush2.bf16.msra.mxu0 0
  %479 = vmatprep.subr.bf16.mxu0 0
  %480 = vmatpush2.bf16.msra.mxu0 0
  %481 = vmatprep.subr.bf16.mxu0 0
  %482 = vmatpush2.bf16.msra.mxu0 0
  %483 = vmatprep.subr.bf16.mxu0 0
  %484 = vmatpush2.bf16.msra.mxu0 0
  %485 = vmatprep.subr.bf16.mxu0 0
  %486 = vmatpush2.bf16.msra.mxu0 0
  %487 = vmatprep.mubr.bf16.mxu0 0
  %488 = vmatmul.mubr.bf16.gmra.mxu0 %v134
  %v489 = vpop.f32.mrf.mxu0
  %v490 = vadd.f32 %v188, %v489
  %v491 = vpop.f32.mrf.mxu0
  %v492 = vadd.f32 %v192, %v491
  %v493 = vpop.f32.mrf.mxu0
  %v494 = vpop.f32.mrf.mxu0
  %495 = vdwg.mxu0
  %496 = vmatprep.subr.bf16.mxu0 %v404
  %497 = vmatpush1.bf16.msra.mxu0 %v403
  %498 = vmatprep.subr.bf16.mxu0 %v398
  %499 = vmatpush1.bf16.msra.mxu0 %v397
  %500 = vmatprep.subr.bf16.mxu0 %v392
  %501 = vmatpush1.bf16.msra.mxu0 %v391
  %502 = vmatprep.subr.bf16.mxu0 %v386
  %503 = vmatpush1.bf16.msra.mxu0 %v385
  %504 = vmatprep.subr.bf16.mxu0 %v380
  %505 = vmatpush1.bf16.msra.mxu0 %v379
  %506 = vmatprep.subr.bf16.mxu0 %v374
  %507 = vmatpush1.bf16.msra.mxu0 %v373
  %508 = vmatprep.subr.bf16.mxu0 %v368
  %509 = vmatpush1.bf16.msra.mxu0 %v367
  %510 = vmatprep.subr.bf16.mxu0 %v362
  %511 = vmatpush1.bf16.msra.mxu0 %v361
  %512 = vmatprep.subr.bf16.mxu0 0
  %513 = vmatpush2.bf16.msra.mxu0 0
  %514 = vmatprep.subr.bf16.mxu0 0
  %515 = vmatpush2.bf16.msra.mxu0 0
  %516 = vmatprep.subr.bf16.mxu0 0
  %517 = vmatpush2.bf16.msra.mxu0 0
  %518 = vmatprep.subr.bf16.mxu0 0
  %519 = vmatpush2.bf16.msra.mxu0 0
  %520 = vmatprep.subr.bf16.mxu0 0
  %521 = vmatpush2.bf16.msra.mxu0 0
  %522 = vmatprep.subr.bf16.mxu0 0
  %523 = vmatpush2.bf16.msra.mxu0 0
  %524 = vmatprep.subr.bf16.mxu0 0
  %525 = vmatpush2.bf16.msra.mxu0 0
  %526 = vmatprep.subr.bf16.mxu0 0
  %527 = vmatpush2.bf16.msra.mxu0 0
  %528 = vmatprep.mubr.bf16.mxu0 0
  %529 = vmatmul.mubr.bf16.gmra.mxu0 %v134
  %v530 = vpop.f32.mrf.mxu0
  %v531 = vadd.f32 %v196, %v530
  %v532 = vpop.f32.mrf.mxu0
  %v533 = vadd.f32 %v200, %v532
  %v534 = vpop.f32.mrf.mxu0
  %v535 = vpop.f32.mrf.mxu0
  %536 = vdwg.mxu0
  %537 = vmatprep.subr.bf16.mxu0 %v406
  %538 = vmatpush1.bf16.msra.mxu0 %v405
  %539 = vmatprep.subr.bf16.mxu0 %v400
  %540 = vmatpush1.bf16.msra.mxu0 %v399
  %541 = vmatprep.subr.bf16.mxu0 %v394
  %542 = vmatpush1.bf16.msra.mxu0 %v393
  %543 = vmatprep.subr.bf16.mxu0 %v388
  %544 = vmatpush1.bf16.msra.mxu0 %v387
  %545 = vmatprep.subr.bf16.mxu0 %v382
  %546 = vmatpush1.bf16.msra.mxu0 %v381
  %547 = vmatprep.subr.bf16.mxu0 %v376
  %548 = vmatpush1.bf16.msra.mxu0 %v375
  %549 = vmatprep.subr.bf16.mxu0 %v370
  %550 = vmatpush1.bf16.msra.mxu0 %v369
  %551 = vmatprep.subr.bf16.mxu0 %v364
  %552 = vmatpush1.bf16.msra.mxu0 %v363
  %553 = vmatprep.subr.bf16.mxu0 0
  %554 = vmatpush2.bf16.msra.mxu0 0
  %555 = vmatprep.subr.bf16.mxu0 0
  %556 = vmatpush2.bf16.msra.mxu0 0
  %557 = vmatprep.subr.bf16.mxu0 0
  %558 = vmatpush2.bf16.msra.mxu0 0
  %559 = vmatprep.subr.bf16.mxu0 0
  %560 = vmatpush2.bf16.msra.mxu0 0
  %561 = vmatprep.subr.bf16.mxu0 0
  %562 = vmatpush2.bf16.msra.mxu0 0
  %563 = vmatprep.subr.bf16.mxu0 0
  %564 = vmatpush2.bf16.msra.mxu0 0
  %565 = vmatprep.subr.bf16.mxu0 0
  %566 = vmatpush2.bf16.msra.mxu0 0
  %567 = vmatprep.subr.bf16.mxu0 0
  %568 = vmatpush2.bf16.msra.mxu0 0
  %569 = vmatprep.mubr.bf16.mxu0 0
  %570 = vmatmul.mubr.bf16.gmra.mxu0 %v134
  %v571 = vpop.f32.mrf.mxu0
  %v572 = vadd.f32 %v204, %v571
  %v573 = vpop.f32.mrf.mxu0
  %v574 = vadd.f32 %v208, %v573
  %v575 = vpop.f32.mrf.mxu0
  %v576 = vpop.f32.mrf.mxu0
  %577 = vdwg.mxu0
  %578 = vst [vmem:[%s5] sm:$0xff] %v490
  %579 = vst [vmem:[%s5 + $0x8] sm:$0xff] %v492
  %580 = vst [vmem:[%s5 + $0x10] sm:$0xff] %v531
  %581 = vst [vmem:[%s5 + $0x18] sm:$0xff] %v533
  %582 = vst [vmem:[%s5 + $0x20] sm:$0xff] %v572
  %583 = vst [vmem:[%s5 + $0x28] sm:$0xff] %v574
  // Predicated region
  $region22: #{sudoku_forward.1} parent=0 // pred_check
    _
  $region23: #{sudoku_forward.1} parent=0 // pred_check_branch
    %585 = sbr.rel (0) target = $region25
  $region24: #{sudoku_forward.1} parent=0 // pred_region
    _
  $region25: #{sudoku_forward.1} parent=0 // pred_fallthru
    _
  // Predicated region
  $region26: #{sudoku_forward.1} parent=0 // pred_check
    _
  $region27: #{sudoku_forward.1} parent=0 // pred_check_branch
    %587 = sbr.rel (0) target = $region29
  $region28: #{sudoku_forward.1} parent=0 // pred_region
    _
  $region29: #{sudoku_forward.1} parent=0 // pred_fallthru
    _

</llo_original>
